<compile_context>
chip_gen: v7x
topology: tpu7x:2x2x1
jax: 0.10.0
libtpu: 0.0.40
codegen_flags: <defaults>
</compile_context>

<pallas_src>
import functools

import jax
import jax.numpy as jnp
from jax import lax
from jax.experimental import pallas as pl
from jax.experimental.pallas import tpu as pltpu


def _round_up(x, m):
    return ((x + m - 1) // m) * m


# ----------------------------------------------------------------------------
# Fused kernel: mask head on both branches + BCE / intersection / union
# partial sums, accumulated across pixel tiles into resident output blocks.
# ----------------------------------------------------------------------------
def _fused_head_loss_kernel(out_ref, img_ref, w1a_ref, w2t_ref, b2_ref,
                            bce_ref, inter_ref, union_ref,
                            *, n_inner, tile_p, valid_p):
    # out_ref/img_ref : (1, C+1, TILE_P) bf16 channels-first pixel tile; the
    #                   last channel is a constant 1 (folds b1 into the dot).
    # w1a_ref : (Ch, C+1) bf16 = [w1^T | b1],   w2t_ref : (1, Ch) f32,
    # b2_ref  : (1, 1) f32
    # bce/inter/union : (1, 1, 1, TILE_P) f32 resident per-(image, chunk)
    #                   lane-dense accumulators.
    g = pl.program_id(1)      # pixel chunk (parallel, feeds v7x megacore)
    t = pl.program_id(2)      # pixel tile within the chunk (reduction axis)

    @pl.when(t == 0)
    def _init():
        bce_ref[...] = jnp.zeros_like(bce_ref)
        inter_ref[...] = jnp.zeros_like(inter_ref)
        union_ref[...] = jnp.zeros_like(union_ref)

    def head(x):  # x: (C+1, TILE_P) bf16 -> mask logits (1, TILE_P) f32
        h = jnp.dot(w1a_ref[...], x, preferred_element_type=jnp.float32)
        h = jnp.maximum(h, 0.0)                      # b1 already folded in
        z = jnp.dot(w2t_ref[...], h, preferred_element_type=jnp.float32)
        return z + b2_ref[...]                       # (1, TILE_P) add: tiny

    z = head(out_ref[0])       # predicted mask logits ("results" branch)
    gz = head(img_ref[0])      # pseudo-GT mask logits ("gt_results" branch)

    # pseudo ground-truth / predicted binary masks: sigmoid(x) > 0.5 <=> x > 0
    gt_mask = (gz > 0.0).astype(jnp.float32)
    pred_mask = (z > 0.0).astype(jnp.float32)

    # numerically stable BCE-with-logits (the "sum over the loss dict"
    # collapses to this single surrogate mask-loss term here)
    bce = jnp.maximum(z, 0.0) - z * gt_mask + jnp.log1p(jnp.exp(-jnp.abs(z)))
    inter = pred_mask * gt_mask
    union = jnp.maximum(pred_mask, gt_mask)

    if valid_p is not None:    # static: only emitted when P was padded
        start = (g * n_inner + t) * tile_p
        lane = lax.broadcasted_iota(jnp.int32, (1, tile_p), 1)
        valid = ((start + lane) < valid_p).astype(jnp.float32)
        bce = bce * valid
        inter = inter * valid
        union = union * valid

    bce_ref[0, 0] = bce_ref[0, 0] + bce
    inter_ref[0, 0] = inter_ref[0, 0] + inter
    union_ref[0, 0] = union_ref[0, 0] + union


def _pick_tile(p, max_tile=16 * 1024):
    """Largest lane-aligned pixel tile within a conservative VMEM budget.

    Per-lane VMEM ~= 2 inputs x 2 bufs x 16 sublanes x 2 B (bf16 tiles)
                   + (32, tile) f32 hidden activation + small temporaries
                   + 3 outs x 2 bufs x 8 sublanes x 4 B
                  ~= 0.5 KiB/lane, so 16K lanes ~= 8-11 MiB: safely inside the
    32 MiB scoped-VMEM default on every chip and v7x's 64 MiB physical VMEM,
    while amortizing the ~0.35 us per-grid-step pipeline overhead.
    """
    return min(max_tile, _round_up(p, 128))


def fused_mask_head_loss(outputs_aug, imgs_aug, w1a, w2t, b2c,
                         *, n_chunks, n_inner, tile_p, valid_p):
    b, caug, p_pad = outputs_aug.shape
    ch = w1a.shape[0]
    assert p_pad == n_chunks * n_inner * tile_p

    kernel = functools.partial(_fused_head_loss_kernel,
                               n_inner=n_inner, tile_p=tile_p, valid_p=valid_p)

    acc_shape = jax.ShapeDtypeStruct((b, n_chunks, 1, tile_p), jnp.float32)
    acc_spec = pl.BlockSpec((1, 1, 1, tile_p), lambda i, g, t: (i, g, 0, 0))

    grid_spec = pltpu.PrefetchScalarGridSpec(
        num_scalar_prefetch=0,
        grid=(b, n_chunks, n_inner),
        in_specs=[
            pl.BlockSpec((1, caug, tile_p),
                         lambda i, g, t: (i, 0, g * n_inner + t)),  # outputs
            pl.BlockSpec((1, caug, tile_p),
                         lambda i, g, t: (i, 0, g * n_inner + t)),  # imgs
            pl.BlockSpec((ch, caug), lambda i, g, t: (0, 0)),       # [w1^T|b1]
            pl.BlockSpec((1, ch), lambda i, g, t: (0, 0)),          # w2^T
            pl.BlockSpec((1, 1), lambda i, g, t: (0, 0)),           # b2
        ],
        out_specs=(acc_spec, acc_spec, acc_spec),
    )

    return pl.pallas_call(
        kernel,
        out_shape=(acc_shape, acc_shape, acc_shape),
        grid_spec=grid_spec,
        compiler_params=pltpu.CompilerParams(
            dimension_semantics=("parallel", "parallel", "arbitrary"),
            vmem_limit_bytes=32 * 1024 * 1024),
    )(outputs_aug, imgs_aug, w1a, w2t, b2c)


# ----------------------------------------------------------------------------
# Wrapper reproducing MaskRCNNLoss.forward semantics
# ----------------------------------------------------------------------------
@jax.jit
def mask_rcnn_loss(outputs, imgs, params):
    # outputs, imgs: NCHW (B, 3, H, W), like the PyTorch module's inputs.
    # Running the synthetic model on cat([outputs, imgs]) is equivalent to
    # running it on each half (per-image head), so no concat copy is made.
    w1, b1, w2, b2 = params
    b, c, h, w = imgs.shape
    p = h * w
    hidden = w1.shape[1]

    tile_p = _pick_tile(p)
    n_t = (p + tile_p - 1) // tile_p
    p_pad = n_t * tile_p
    n_chunks = 2 if (n_t >= 2 and n_t % 2 == 0) else 1   # v7x dual-TC split
    n_inner = n_t // n_chunks
    valid_p = p if p_pad != p else None                  # mask padded lanes

    def augment(x):
        # channels-first flatten (free), bf16 cast (halves HBM read), ones
        # channel to fold b1 into the MXU dot, zero-pad pixels to tile_p.
        xf = x.reshape(b, c, p).astype(jnp.bfloat16)
        ones = jnp.ones((b, 1, p), jnp.bfloat16)
        xa = jnp.concatenate([xf, ones], axis=1)
        if p_pad != p:
            xa = jnp.pad(xa, ((0, 0), (0, 0), (0, p_pad - p)))
        return xa

    outputs_aug = augment(outputs)
    imgs_aug = augment(imgs)

    # tiny weights, laid out for channels-on-sublane / pixels-on-lane compute
    w1a = jnp.concatenate([jnp.transpose(w1), b1.reshape(hidden, 1)],
                          axis=1).astype(jnp.bfloat16)      # (Ch, C+1)
    w2t = w2.reshape(1, hidden).astype(jnp.float32)          # (1, Ch)
    b2c = b2.reshape(1, 1).astype(jnp.float32)               # (1, 1)

    bce_acc, inter_acc, union_acc = fused_mask_head_loss(
        outputs_aug, imgs_aug, w1a, w2t, b2c,
        n_chunks=n_chunks, n_inner=n_inner, tile_p=tile_p, valid_p=valid_p)

    # tiny final reductions (B x n_chunks x TILE_P elements)
    loss = jnp.sum(bce_acc) / float(b * p)                   # mean mask BCE
    inter = jnp.sum(inter_acc, axis=(1, 2, 3))                # (B,)
    union = jnp.sum(union_acc, axis=(1, 2, 3))                # (B,)
    iou = inter / (union + 1e-6)                              # per-image IoU
    accuracy = jnp.mean(iou)                                  # mIoU
    return loss, accuracy


if __name__ == "__main__":
    B, C, H, W = 2, 3, 16, 16
    HIDDEN = 32

    key = jax.random.PRNGKey(0)
    k_out, k_img, k_w1, k_w2 = jax.random.split(key, 4)

    outputs = jax.random.normal(k_out, (B, C, H, W), dtype=jnp.float32)
    imgs = jax.random.normal(k_img, (B, C, H, W), dtype=jnp.float32)

    # deterministic synthetic "model" parameters
    w1 = jax.random.normal(k_w1, (C, HIDDEN), dtype=jnp.float32) * 0.2
    b1 = jnp.zeros((HIDDEN,), dtype=jnp.float32)
    w2 = jax.random.normal(k_w2, (HIDDEN, 1), dtype=jnp.float32) * 0.2
    b2 = jnp.zeros((1,), dtype=jnp.float32)
    params = (w1, b1, w2, b2)

    loss, acc = mask_rcnn_loss(outputs, imgs, params)
    jax.block_until_ready((loss, acc))
    assert jnp.isfinite(loss) and jnp.isfinite(acc)
    print("KERNEL_OK")
</pallas_src>

<mosaic_0001>
module attributes {stable_mosaic.version = 11 : i64} {
  func.func @_fused_head_loss_kernel(%arg0: i32, %arg1: i32, %arg2: i32, %arg3: memref<1x4x256xbf16, #tpu.memory_space<vmem>>, %arg4: memref<1x4x256xbf16, #tpu.memory_space<vmem>>, %arg5: memref<32x4xbf16, #tpu.memory_space<vmem>>, %arg6: memref<1x32xf32, #tpu.memory_space<vmem>>, %arg7: memref<1x1xf32, #tpu.memory_space<vmem>>, %arg8: memref<1x1x1x256xf32, #tpu.memory_space<vmem>>, %arg9: memref<1x1x1x256xf32, #tpu.memory_space<vmem>>, %arg10: memref<1x1x1x256xf32, #tpu.memory_space<vmem>>) attributes {dimension_semantics = [#tpu.dimension_semantics<parallel>, #tpu.dimension_semantics<parallel>, #tpu.dimension_semantics<arbitrary>], iteration_bounds = array<i64: 2, 1, 1>, scalar_prefetch = 0 : i64, scratch_operands = 0 : i64, tpu.core_type = #tpu.core_type<tc>, window_params = [{transform_indices = @transform_0, window_bounds = array<i64: 1, 4, 256>}, {transform_indices = @transform_1, window_bounds = array<i64: 1, 4, 256>}, {pipeline_mode = #tpu.pipeline_mode<synchronous>, transform_indices = @transform_2, window_bounds = array<i64: 32, 4>}, {pipeline_mode = #tpu.pipeline_mode<synchronous>, transform_indices = @transform_3, window_bounds = array<i64: 1, 32>}, {pipeline_mode = #tpu.pipeline_mode<synchronous>, transform_indices = @transform_4, window_bounds = array<i64: 1, 1>}, {transform_indices = @transform_5, window_bounds = array<i64: 1, 1, 1, 256>}, {transform_indices = @transform_6, window_bounds = array<i64: 1, 1, 1, 256>}, {transform_indices = @transform_7, window_bounds = array<i64: 1, 1, 1, 256>}]} {
    %c0_i32 = arith.constant 0 : i32
    %0 = arith.cmpi eq, %arg2, %c0_i32 : i32
    %1 = arith.extui %0 : i1 to i32
    %c0_i32_0 = arith.constant 0 : i32
    %2 = arith.cmpi ne, %1, %c0_i32_0 : i32
    scf.if %2 {
      %cst_51 = arith.constant 0.000000e+00 : f32
      %63 = vector.broadcast %cst_51 : f32 to vector<1x1x1x256xf32>
      %c0_52 = arith.constant 0 : index
      %c0_53 = arith.constant 0 : index
      %c0_54 = arith.constant 0 : index
      %c0_55 = arith.constant 0 : index
      %64 = vector.load %arg8[%c0_52, %c0_53, %c0_54, %c0_55] : memref<1x1x1x256xf32, #tpu.memory_space<vmem>>, vector<1x1x1x256xf32>
      tpu.vector_store %arg8[%c0_52, %c0_53, %c0_54, %c0_55], %63 {strides = array<i32>} : memref<1x1x1x256xf32, #tpu.memory_space<vmem>>, vector<1x1x1x256xf32>,
      %cst_56 = arith.constant 0.000000e+00 : f32
      %65 = vector.broadcast %cst_56 : f32 to vector<1x1x1x256xf32>
      %c0_57 = arith.constant 0 : index
      %c0_58 = arith.constant 0 : index
      %c0_59 = arith.constant 0 : index
      %c0_60 = arith.constant 0 : index
      %66 = vector.load %arg9[%c0_57, %c0_58, %c0_59, %c0_60] : memref<1x1x1x256xf32, #tpu.memory_space<vmem>>, vector<1x1x1x256xf32>
      tpu.vector_store %arg9[%c0_57, %c0_58, %c0_59, %c0_60], %65 {strides = array<i32>} : memref<1x1x1x256xf32, #tpu.memory_space<vmem>>, vector<1x1x1x256xf32>,
      %cst_61 = arith.constant 0.000000e+00 : f32
      %67 = vector.broadcast %cst_61 : f32 to vector<1x1x1x256xf32>
      %c0_62 = arith.constant 0 : index
      %c0_63 = arith.constant 0 : index
      %c0_64 = arith.constant 0 : index
      %c0_65 = arith.constant 0 : index
      %68 = vector.load %arg10[%c0_62, %c0_63, %c0_64, %c0_65] : memref<1x1x1x256xf32, #tpu.memory_space<vmem>>, vector<1x1x1x256xf32>
      tpu.vector_store %arg10[%c0_62, %c0_63, %c0_64, %c0_65], %67 {strides = array<i32>} : memref<1x1x1x256xf32, #tpu.memory_space<vmem>>, vector<1x1x1x256xf32>,
    } else {
    }
    %c0 = arith.constant 0 : index
    %c0_1 = arith.constant 0 : index
    %c0_2 = arith.constant 0 : index
    %3 = vector.load %arg3[%c0, %c0_1, %c0_2] : memref<1x4x256xbf16, #tpu.memory_space<vmem>>, vector<1x4x256xbf16>
    %4 = vector.shape_cast %3 : vector<1x4x256xbf16> to vector<4x256xbf16>
    %c0_3 = arith.constant 0 : index
    %c0_4 = arith.constant 0 : index
    %5 = vector.load %arg5[%c0_3, %c0_4] : memref<32x4xbf16, #tpu.memory_space<vmem>>, vector<32x4xbf16>
    %cst = arith.constant dense<0.000000e+00> : vector<32x256xf32>
    %6 = tpu.matmul %5, %4, %cst {dimension_numbers = #tpu.dot_dimension_numbers<[1], [0], [0], [1], [0, 0, 1, 1], [], []>} : vector<32x4xbf16>, vector<4x256xbf16>, vector<32x256xf32> -> vector<32x256xf32>
    %cst_5 = arith.constant 0.000000e+00 : f32
    %7 = vector.broadcast %cst_5 : f32 to vector<32x256xf32>
    %8 = arith.maximumf %6, %7 : vector<32x256xf32>
    %c0_6 = arith.constant 0 : index
    %c0_7 = arith.constant 0 : index
    %9 = vector.load %arg6[%c0_6, %c0_7] : memref<1x32xf32, #tpu.memory_space<vmem>>, vector<1x32xf32>
    %cst_8 = arith.constant dense<0.000000e+00> : vector<1x256xf32>
    %10 = tpu.matmul %9, %8, %cst_8 {dimension_numbers = #tpu.dot_dimension_numbers<[1], [0], [0], [1], [0, 0, 1, 1], [], []>} : vector<1x32xf32>, vector<32x256xf32>, vector<1x256xf32> -> vector<1x256xf32>
    %c0_9 = arith.constant 0 : index
    %c0_10 = arith.constant 0 : index
    %11 = vector.load %arg7[%c0_9, %c0_10] : memref<1x1xf32, #tpu.memory_space<vmem>>, vector<1x1xf32>
    %12 = vector.broadcast %11 : vector<1x1xf32> to vector<1x256xf32>
    %13 = arith.addf %10, %12 : vector<1x256xf32>
    %c0_11 = arith.constant 0 : index
    %c0_12 = arith.constant 0 : index
    %c0_13 = arith.constant 0 : index
    %14 = vector.load %arg4[%c0_11, %c0_12, %c0_13] : memref<1x4x256xbf16, #tpu.memory_space<vmem>>, vector<1x4x256xbf16>
    %15 = vector.shape_cast %14 : vector<1x4x256xbf16> to vector<4x256xbf16>
    %c0_14 = arith.constant 0 : index
    %c0_15 = arith.constant 0 : index
    %16 = vector.load %arg5[%c0_14, %c0_15] : memref<32x4xbf16, #tpu.memory_space<vmem>>, vector<32x4xbf16>
    %cst_16 = arith.constant dense<0.000000e+00> : vector<32x256xf32>
    %17 = tpu.matmul %16, %15, %cst_16 {dimension_numbers = #tpu.dot_dimension_numbers<[1], [0], [0], [1], [0, 0, 1, 1], [], []>} : vector<32x4xbf16>, vector<4x256xbf16>, vector<32x256xf32> -> vector<32x256xf32>
    %cst_17 = arith.constant 0.000000e+00 : f32
    %18 = vector.broadcast %cst_17 : f32 to vector<32x256xf32>
    %19 = arith.maximumf %17, %18 : vector<32x256xf32>
    %c0_18 = arith.constant 0 : index
    %c0_19 = arith.constant 0 : index
    %20 = vector.load %arg6[%c0_18, %c0_19] : memref<1x32xf32, #tpu.memory_space<vmem>>, vector<1x32xf32>
    %cst_20 = arith.constant dense<0.000000e+00> : vector<1x256xf32>
    %21 = tpu.matmul %20, %19, %cst_20 {dimension_numbers = #tpu.dot_dimension_numbers<[1], [0], [0], [1], [0, 0, 1, 1], [], []>} : vector<1x32xf32>, vector<32x256xf32>, vector<1x256xf32> -> vector<1x256xf32>
    %c0_21 = arith.constant 0 : index
    %c0_22 = arith.constant 0 : index
    %22 = vector.load %arg7[%c0_21, %c0_22] : memref<1x1xf32, #tpu.memory_space<vmem>>, vector<1x1xf32>
    %23 = vector.broadcast %22 : vector<1x1xf32> to vector<1x256xf32>
    %24 = arith.addf %21, %23 : vector<1x256xf32>
    %cst_23 = arith.constant 0.000000e+00 : f32
    %25 = vector.broadcast %cst_23 : f32 to vector<1x256xf32>
    %26 = arith.cmpf ogt, %24, %25 : vector<1x256xf32>
    %27 = arith.extui %26 : vector<1x256xi1> to vector<1x256xi32>
    %28 = arith.sitofp %27 : vector<1x256xi32> to vector<1x256xf32>
    %cst_24 = arith.constant 0.000000e+00 : f32
    %29 = vector.broadcast %cst_24 : f32 to vector<1x256xf32>
    %30 = arith.cmpf ogt, %13, %29 : vector<1x256xf32>
    %31 = arith.extui %30 : vector<1x256xi1> to vector<1x256xi32>
    %32 = arith.sitofp %31 : vector<1x256xi32> to vector<1x256xf32>
    %cst_25 = arith.constant 0.000000e+00 : f32
    %33 = vector.broadcast %cst_25 : f32 to vector<1x256xf32>
    %34 = arith.maximumf %13, %33 : vector<1x256xf32>
    %35 = arith.mulf %13, %28 : vector<1x256xf32>
    %36 = arith.subf %34, %35 : vector<1x256xf32>
    %37 = math.absf %13 : vector<1x256xf32>
    %cst_26 = arith.constant 0.000000e+00 : f32
    %38 = vector.broadcast %cst_26 : f32 to vector<1x256xf32>
    %39 = arith.subf %38, %37 : vector<1x256xf32>
    %40 = math.exp %39 : vector<1x256xf32>
    %41 = math.log1p %40 : vector<1x256xf32>
    %42 = arith.addf %36, %41 : vector<1x256xf32>
    %43 = arith.mulf %32, %28 : vector<1x256xf32>
    %44 = arith.maximumf %32, %28 : vector<1x256xf32>
    %c0_27 = arith.constant 0 : index
    %c0_28 = arith.constant 0 : index
    %c0_29 = arith.constant 0 : index
    %c0_30 = arith.constant 0 : index
    %45 = vector.load %arg8[%c0_27, %c0_28, %c0_29, %c0_30] : memref<1x1x1x256xf32, #tpu.memory_space<vmem>>, vector<1x1x1x256xf32>
    %46 = vector.shape_cast %45 : vector<1x1x1x256xf32> to vector<1x256xf32>
    %47 = arith.addf %46, %42 : vector<1x256xf32>
    %c0_31 = arith.constant 0 : index
    %c0_32 = arith.constant 0 : index
    %c0_33 = arith.constant 0 : index
    %c0_34 = arith.constant 0 : index
    %48 = vector.load %arg8[%c0_31, %c0_32, %c0_33, %c0_34] : memref<1x1x1x256xf32, #tpu.memory_space<vmem>>, vector<1x1x1x256xf32>
    %49 = vector.shape_cast %48 : vector<1x1x1x256xf32> to vector<1x256xf32>
    %50 = vector.shape_cast %47 : vector<1x256xf32> to vector<1x1x1x256xf32>
    tpu.vector_store %arg8[%c0_31, %c0_32, %c0_33, %c0_34], %50 {strides = array<i32>} : memref<1x1x1x256xf32, #tpu.memory_space<vmem>>, vector<1x1x1x256xf32>,
    %c0_35 = arith.constant 0 : index
    %c0_36 = arith.constant 0 : index
    %c0_37 = arith.constant 0 : index
    %c0_38 = arith.constant 0 : index
    %51 = vector.load %arg9[%c0_35, %c0_36, %c0_37, %c0_38] : memref<1x1x1x256xf32, #tpu.memory_space<vmem>>, vector<1x1x1x256xf32>
    %52 = vector.shape_cast %51 : vector<1x1x1x256xf32> to vector<1x256xf32>
    %53 = arith.addf %52, %43 : vector<1x256xf32>
    %c0_39 = arith.constant 0 : index
    %c0_40 = arith.constant 0 : index
    %c0_41 = arith.constant 0 : index
    %c0_42 = arith.constant 0 : index
    %54 = vector.load %arg9[%c0_39, %c0_40, %c0_41, %c0_42] : memref<1x1x1x256xf32, #tpu.memory_space<vmem>>, vector<1x1x1x256xf32>
    %55 = vector.shape_cast %54 : vector<1x1x1x256xf32> to vector<1x256xf32>
    %56 = vector.shape_cast %53 : vector<1x256xf32> to vector<1x1x1x256xf32>
    tpu.vector_store %arg9[%c0_39, %c0_40, %c0_41, %c0_42], %56 {strides = array<i32>} : memref<1x1x1x256xf32, #tpu.memory_space<vmem>>, vector<1x1x1x256xf32>,
    %c0_43 = arith.constant 0 : index
    %c0_44 = arith.constant 0 : index
    %c0_45 = arith.constant 0 : index
    %c0_46 = arith.constant 0 : index
    %57 = vector.load %arg10[%c0_43, %c0_44, %c0_45, %c0_46] : memref<1x1x1x256xf32, #tpu.memory_space<vmem>>, vector<1x1x1x256xf32>
    %58 = vector.shape_cast %57 : vector<1x1x1x256xf32> to vector<1x256xf32>
    %59 = arith.addf %58, %44 : vector<1x256xf32>
    %c0_47 = arith.constant 0 : index
    %c0_48 = arith.constant 0 : index
    %c0_49 = arith.constant 0 : index
    %c0_50 = arith.constant 0 : index
    %60 = vector.load %arg10[%c0_47, %c0_48, %c0_49, %c0_50] : memref<1x1x1x256xf32, #tpu.memory_space<vmem>>, vector<1x1x1x256xf32>
    %61 = vector.shape_cast %60 : vector<1x1x1x256xf32> to vector<1x256xf32>
    %62 = vector.shape_cast %59 : vector<1x256xf32> to vector<1x1x1x256xf32>
    tpu.vector_store %arg10[%c0_47, %c0_48, %c0_49, %c0_50], %62 {strides = array<i32>} : memref<1x1x1x256xf32, #tpu.memory_space<vmem>>, vector<1x1x1x256xf32>,
    return
  }
  func.func @transform_0(%arg0: i32, %arg1: i32, %arg2: i32) -> (i32, i32, i32) {
    %c1_i32 = arith.constant 1 : i32
    %0 = arith.muli %arg1, %c1_i32 : i32
    %1 = arith.addi %0, %arg2 : i32
    %c0_i32 = arith.constant 0 : i32
    %c0_i32_0 = arith.constant 0 : i32
    return %arg0, %c0_i32, %1 : i32, i32, i32
  }
  func.func @transform_1(%arg0: i32, %arg1: i32, %arg2: i32) -> (i32, i32, i32) {
    %c1_i32 = arith.constant 1 : i32
    %0 = arith.muli %arg1, %c1_i32 : i32
    %1 = arith.addi %0, %arg2 : i32
    %c0_i32 = arith.constant 0 : i32
    %c0_i32_0 = arith.constant 0 : i32
    return %arg0, %c0_i32, %1 : i32, i32, i32
  }
  func.func @transform_2(%arg0: i32, %arg1: i32, %arg2: i32) -> (i32, i32) {
    %c0_i32 = arith.constant 0 : i32
    %c0_i32_0 = arith.constant 0 : i32
    %c0_i32_1 = arith.constant 0 : i32
    return %c0_i32, %c0_i32_0 : i32, i32
  }
  func.func @transform_3(%arg0: i32, %arg1: i32, %arg2: i32) -> (i32, i32) {
    %c0_i32 = arith.constant 0 : i32
    %c0_i32_0 = arith.constant 0 : i32
    %c0_i32_1 = arith.constant 0 : i32
    return %c0_i32, %c0_i32_0 : i32, i32
  }
  func.func @transform_4(%arg0: i32, %arg1: i32, %arg2: i32) -> (i32, i32) {
    %c0_i32 = arith.constant 0 : i32
    %c0_i32_0 = arith.constant 0 : i32
    %c0_i32_1 = arith.constant 0 : i32
    return %c0_i32, %c0_i32_0 : i32, i32
  }
  func.func @transform_5(%arg0: i32, %arg1: i32, %arg2: i32) -> (i32, i32, i32, i32) {
    %c0_i32 = arith.constant 0 : i32
    %c0_i32_0 = arith.constant 0 : i32
    %c0_i32_1 = arith.constant 0 : i32
    return %arg0, %arg1, %c0_i32, %c0_i32_0 : i32, i32, i32, i32
  }
  func.func @transform_6(%arg0: i32, %arg1: i32, %arg2: i32) -> (i32, i32, i32, i32) {
    %c0_i32 = arith.constant 0 : i32
    %c0_i32_0 = arith.constant 0 : i32
    %c0_i32_1 = arith.constant 0 : i32
    return %arg0, %arg1, %c0_i32, %c0_i32_0 : i32, i32, i32, i32
  }
  func.func @transform_7(%arg0: i32, %arg1: i32, %arg2: i32) -> (i32, i32, i32, i32) {
    %c0_i32 = arith.constant 0 : i32
    %c0_i32_0 = arith.constant 0 : i32
    %c0_i32_1 = arith.constant 0 : i32
    return %arg0, %arg1, %c0_i32, %c0_i32_0 : i32, i32, i32, i32
  }
}

</mosaic_0001>

<llo_original>
// kernel: mask_rcnn_loss.1
$region0: #{mask_rcnn_loss.1}
  #allocation0 [shape = 'u32[]', space=smem, size = 0x4, offset = 0x4, fixed_abs, tag = 'smem constant byte address 0x4 - core index']
  #allocation1 [shape = 'u32[144,128]{1,0:T(1,128)}', space=vmem, size = 0x12000, scoped, tag = 'internal scratch']
  #allocation2 [shape = 'f32[1,1]{1,0:T(1,128)S(1)}', space=vmem, size = 0x200, scoped, tag = 'scoped memory for mask_rcnn_loss.1']
  %s0 = inlined_call_operand.vmem [shape: bf16[2,4,256], index: 0, kind: input, shape index: {}]
  %s1 = inlined_call_operand.vmem [shape: bf16[2,4,256], index: 1, kind: input, shape index: {}]
  %s2 = inlined_call_operand.vmem [shape: bf16[32,4], index: 2, kind: input, shape index: {}]
  %s3 = inlined_call_operand.vmem [shape: f32[1,32], index: 3, kind: input, shape index: {}]
  %s4 = inlined_call_operand.<no memory space> [shape: f32[1,1], index: 4, kind: input, shape index: {}]
  %s5 = inlined_call_operand.vmem [shape: f32[2,1,1,256], index: 5, kind: output, shape index: {0}]
  %s6 = inlined_call_operand.vmem [shape: f32[2,1,1,256], index: 6, kind: output, shape index: {1}]
  %s7 = inlined_call_operand.vmem [shape: f32[2,1,1,256], index: 7, kind: output, shape index: {2}]
  %8 = xla_tuple %s5, %s6, %s7
  %s9 = sld [smem:[#allocation0]]
  $region73: #{mask_rcnn_loss.1} parent=0
    _
  %s11 = ssub.s32 1, %s9
  %s12 = scalar_select 0, %s11, %s9
  %v13 = vstv %s4
  %14 = vst [vmem:[#allocation2] sm:$0x1] %v13
  loop: start=0, step=1, limit=4
  $region2: #{mask_rcnn_loss.1} parent=0 // loop_pre_header
    _
  $region3: #{mask_rcnn_loss.1} parent=0 // loop_header
    %s16 = sphi 0, %s20
    %p17 = scmp.ge.s32.totalorder %s16, 4
    %s23 = sphi 0, %s42
    %s24 = sphi 0, %s38
    %s25 = sphi 0, %s34
    %s26 = sphi 0, %s23
    %s27 = sphi 0, %s24
    %s28 = sphi 0, %s25
    %s29 = sphi 0, %s26
    %s30 = sphi 0, %s27
    %s31 = sphi 0, %s28
    %s49 = sphi 0, %s51
    %s52 = sphi 0, %s49
    %s53 = sphi 0, %s52
    %s69 = sphi 0, %s53
    %s79 = sphi 0, %s81
    %s82 = sphi 0, %s79
    %s83 = sphi 0, %s82
    %s99 = sphi 0, %s83
    %s103 = sphi 0, %s103
    %s105 = sphi 0, %s103
    %s106 = sphi 0, %s105
    %s120 = sphi 0, %s106
    %s124 = sphi 0, %s124
    %s126 = sphi 0, %s124
    %s127 = sphi 0, %s126
    %s141 = sphi 0, %s127
    %s145 = sphi 0, %s145
    %s147 = sphi 0, %s145
    %s148 = sphi 0, %s147
    %s162 = sphi 0, %s148
    %s170 = sphi 0, %s172
    %s173 = sphi 0, %s170
    %s174 = sphi 0, %s173
    %s190 = sphi 0, %s174
    %s198 = sphi 0, %s200
    %s201 = sphi 0, %s198
    %s202 = sphi 0, %s201
    %s218 = sphi 0, %s202
    %s226 = sphi 0, %s228
    %s229 = sphi 0, %s226
    %s230 = sphi 0, %s229
    %s246 = sphi 0, %s230
  $region4: #{mask_rcnn_loss.1} parent=0 // loop_header_branch
    %19 = sbr.rel (%p17) target = $region8
  $region5: #{mask_rcnn_loss.1} parent=0 // loop_body
    %s21 = ssub.s32 %s16, 1
    %s22 = ssub.s32 %s16, 2
    %s32 = sadd.s32 1, %s25
    %p33 = scmp.ge.s32.totalorder %s32, 1
    %s34 = scalar_select %p33, 0, %s32
    %s35 = sadd.s32 1, %s24
    %s36 = scalar_select %p33, %s35, %s24
    %p37 = scmp.ge.s32.totalorder %s36, 1
    %s38 = scalar_select %p37, 0, %s36
    %s39 = sadd.s32 1, %s23
    %s40 = scalar_select %p37, %s39, %s23
    %p41 = scmp.ge.s32.totalorder %s40, 2
    %s42 = scalar_select %p41, 0, %s40
    %s43 = sadd.s32 %s24, %s25
    %s44 = sadd.s32 %s38, %s34
    %s45 = ssub.s32 %s23, %s42
    %s46 = ssub.s32 %s43, %s44
    %s47 = sor.u32 %s45, %s46
    %p48 = scmp.eq.s32.totalorder %s47, 0
    %s50 = sadd.s32 %s49, 1
    %s51 = scalar_select %p48, %s49, %s50
    %p54 = pneg %p48
    %p55 = scmp.eq.s32.totalorder %s16, 1
    %p56 = por %p54, %p55
    %p57 = scmp.ne.s32.totalorder %s49, %s52
    %p58 = scmp.eq.s32.totalorder %s16, 0
    %p59 = por %p57, %p58
    %p60 = scmp.ne.s32.totalorder %s49, %s52
    %p61 = scmp.eq.s32.totalorder %s21, 1
    %p62 = por %p60, %p61
    %p63 = scmp.ne.s32.totalorder %s52, %s53
    %p64 = scmp.eq.s32.totalorder %s21, 0
    %p65 = por %p63, %p64
    %p66 = scmp.ne.s32.totalorder %s52, %s53
    %p67 = scmp.eq.s32.totalorder %s22, 1
    %p68 = por %p66, %p67
    %p70 = scmp.ne.s32.totalorder %s53, %s69
    %p71 = scmp.eq.s32.totalorder %s22, 0
    %p72 = por %p70, %p71
    %s73 = sadd.s32 %s24, %s25
    %s74 = sadd.s32 %s38, %s34
    %s75 = ssub.s32 %s23, %s42
    %s76 = ssub.s32 %s73, %s74
    %s77 = sor.u32 %s75, %s76
    %p78 = scmp.eq.s32.totalorder %s77, 0
    %s80 = sadd.s32 %s79, 1
    %s81 = scalar_select %p78, %s79, %s80
    %p84 = pneg %p78
    %p85 = scmp.eq.s32.totalorder %s16, 1
    %p86 = por %p84, %p85
    %p87 = scmp.ne.s32.totalorder %s79, %s82
    %p88 = scmp.eq.s32.totalorder %s16, 0
    %p89 = por %p87, %p88
    %p90 = scmp.ne.s32.totalorder %s79, %s82
    %p91 = scmp.eq.s32.totalorder %s21, 1
    %p92 = por %p90, %p91
    %p93 = scmp.ne.s32.totalorder %s82, %s83
    %p94 = scmp.eq.s32.totalorder %s21, 0
    %p95 = por %p93, %p94
    %p96 = scmp.ne.s32.totalorder %s82, %s83
    %p97 = scmp.eq.s32.totalorder %s22, 1
    %p98 = por %p96, %p97
    %p100 = scmp.ne.s32.totalorder %s83, %s99
    %p101 = scmp.eq.s32.totalorder %s22, 0
    %p102 = por %p100, %p101
    %s104 = sadd.s32 %s103, 1
    %p107 = scmp.eq.s32.totalorder %s16, 1
    %p108 = scmp.ne.s32.totalorder %s103, %s105
    %p109 = scmp.eq.s32.totalorder %s16, 0
    %p110 = por %p108, %p109
    %p111 = scmp.ne.s32.totalorder %s103, %s105
    %p112 = scmp.eq.s32.totalorder %s21, 1
    %p113 = por %p111, %p112
    %p114 = scmp.ne.s32.totalorder %s105, %s106
    %p115 = scmp.eq.s32.totalorder %s21, 0
    %p116 = por %p114, %p115
    %p117 = scmp.ne.s32.totalorder %s105, %s106
    %p118 = scmp.eq.s32.totalorder %s22, 1
    %p119 = por %p117, %p118
    %p121 = scmp.ne.s32.totalorder %s106, %s120
    %p122 = scmp.eq.s32.totalorder %s22, 0
    %p123 = por %p121, %p122
    %s125 = sadd.s32 %s124, 1
    %p128 = scmp.eq.s32.totalorder %s16, 1
    %p129 = scmp.ne.s32.totalorder %s124, %s126
    %p130 = scmp.eq.s32.totalorder %s16, 0
    %p131 = por %p129, %p130
    %p132 = scmp.ne.s32.totalorder %s124, %s126
    %p133 = scmp.eq.s32.totalorder %s21, 1
    %p134 = por %p132, %p133
    %p135 = scmp.ne.s32.totalorder %s126, %s127
    %p136 = scmp.eq.s32.totalorder %s21, 0
    %p137 = por %p135, %p136
    %p138 = scmp.ne.s32.totalorder %s126, %s127
    %p139 = scmp.eq.s32.totalorder %s22, 1
    %p140 = por %p138, %p139
    %p142 = scmp.ne.s32.totalorder %s127, %s141
    %p143 = scmp.eq.s32.totalorder %s22, 0
    %p144 = por %p142, %p143
    %s146 = sadd.s32 %s145, 1
    %p149 = scmp.eq.s32.totalorder %s16, 1
    %p150 = scmp.ne.s32.totalorder %s145, %s147
    %p151 = scmp.eq.s32.totalorder %s16, 0
    %p152 = por %p150, %p151
    %p153 = scmp.ne.s32.totalorder %s145, %s147
    %p154 = scmp.eq.s32.totalorder %s21, 1
    %p155 = por %p153, %p154
    %p156 = scmp.ne.s32.totalorder %s147, %s148
    %p157 = scmp.eq.s32.totalorder %s21, 0
    %p158 = por %p156, %p157
    %p159 = scmp.ne.s32.totalorder %s147, %s148
    %p160 = scmp.eq.s32.totalorder %s22, 1
    %p161 = por %p159, %p160
    %p163 = scmp.ne.s32.totalorder %s148, %s162
    %p164 = scmp.eq.s32.totalorder %s22, 0
    %p165 = por %p163, %p164
    %s166 = ssub.s32 %s23, %s42
    %s167 = ssub.s32 %s24, %s38
    %s168 = sor.u32 %s166, %s167
    %p169 = scmp.eq.s32.totalorder %s168, 0
    %s171 = sadd.s32 %s170, 1
    %s172 = scalar_select %p169, %s170, %s171
    %p175 = pneg %p169
    %p176 = scmp.eq.s32.totalorder %s16, 1
    %p177 = por %p175, %p176
    %p178 = scmp.ne.s32.totalorder %s170, %s173
    %p179 = scmp.eq.s32.totalorder %s16, 0
    %p180 = por %p178, %p179
    %p181 = scmp.ne.s32.totalorder %s170, %s173
    %p182 = scmp.eq.s32.totalorder %s21, 1
    %p183 = por %p181, %p182
    %p184 = scmp.ne.s32.totalorder %s173, %s174
    %p185 = scmp.eq.s32.totalorder %s21, 0
    %p186 = por %p184, %p185
    %p187 = scmp.ne.s32.totalorder %s173, %s174
    %p188 = scmp.eq.s32.totalorder %s22, 1
    %p189 = por %p187, %p188
    %p191 = scmp.ne.s32.totalorder %s174, %s190
    %p192 = scmp.eq.s32.totalorder %s22, 0
    %p193 = por %p191, %p192
    %s194 = ssub.s32 %s23, %s42
    %s195 = ssub.s32 %s24, %s38
    %s196 = sor.u32 %s194, %s195
    %p197 = scmp.eq.s32.totalorder %s196, 0
    %s199 = sadd.s32 %s198, 1
    %s200 = scalar_select %p197, %s198, %s199
    %p203 = pneg %p197
    %p204 = scmp.eq.s32.totalorder %s16, 1
    %p205 = por %p203, %p204
    %p206 = scmp.ne.s32.totalorder %s198, %s201
    %p207 = scmp.eq.s32.totalorder %s16, 0
    %p208 = por %p206, %p207
    %p209 = scmp.ne.s32.totalorder %s198, %s201
    %p210 = scmp.eq.s32.totalorder %s21, 1
    %p211 = por %p209, %p210
    %p212 = scmp.ne.s32.totalorder %s201, %s202
    %p213 = scmp.eq.s32.totalorder %s21, 0
    %p214 = por %p212, %p213
    %p215 = scmp.ne.s32.totalorder %s201, %s202
    %p216 = scmp.eq.s32.totalorder %s22, 1
    %p217 = por %p215, %p216
    %p219 = scmp.ne.s32.totalorder %s202, %s218
    %p220 = scmp.eq.s32.totalorder %s22, 0
    %p221 = por %p219, %p220
    %s222 = ssub.s32 %s23, %s42
    %s223 = ssub.s32 %s24, %s38
    %s224 = sor.u32 %s222, %s223
    %p225 = scmp.eq.s32.totalorder %s224, 0
    %s227 = sadd.s32 %s226, 1
    %s228 = scalar_select %p225, %s226, %s227
    %p231 = pneg %p225
    %p232 = scmp.eq.s32.totalorder %s16, 1
    %p233 = por %p231, %p232
    %p234 = scmp.ne.s32.totalorder %s226, %s229
    %p235 = scmp.eq.s32.totalorder %s16, 0
    %p236 = por %p234, %p235
    %p237 = scmp.ne.s32.totalorder %s226, %s229
    %p238 = scmp.eq.s32.totalorder %s21, 1
    %p239 = por %p237, %p238
    %p240 = scmp.ne.s32.totalorder %s229, %s230
    %p241 = scmp.eq.s32.totalorder %s21, 0
    %p242 = por %p240, %p241
    %p243 = scmp.ne.s32.totalorder %s229, %s230
    %p244 = scmp.eq.s32.totalorder %s22, 1
    %p245 = por %p243, %p244
    %p247 = scmp.ne.s32.totalorder %s230, %s246
    %p248 = scmp.eq.s32.totalorder %s22, 0
    %p249 = por %p247, %p248
    %p250 = scmp.le.s32.totalorder 1, %s16
    %p251 = scmp.lt.s32.totalorder %s16, 3
    %p252 = pnand %p250, %p251
    %p253 = pneg %p252
    // Predicated region
    $region9: #{mask_rcnn_loss.1} parent=5 // pred_check
      _
    $region10: #{mask_rcnn_loss.1} parent=5 // pred_check_branch
      %255 = sbr.rel (%p252) target = $region12
    $region11: #{mask_rcnn_loss.1} parent=5 // pred_region
      %s256 = ssub.s32 %s16, 1
      // Predicated region
      $region13: #{mask_rcnn_loss.1} parent=11 // pred_check
        %p257 = pneg %p116
      $region14: #{mask_rcnn_loss.1} parent=11 // pred_check_branch
        %259 = sbr.rel (%p257) target = $region16
      $region15: #{mask_rcnn_loss.1} parent=11 // pred_region
        _
      $region16: #{mask_rcnn_loss.1} parent=11 // pred_fallthru
        _
      // Predicated region
      $region17: #{mask_rcnn_loss.1} parent=11 // pred_check
        %p260 = pneg %p137
      $region18: #{mask_rcnn_loss.1} parent=11 // pred_check_branch
        %262 = sbr.rel (%p260) target = $region20
      $region19: #{mask_rcnn_loss.1} parent=11 // pred_region
        _
      $region20: #{mask_rcnn_loss.1} parent=11 // pred_fallthru
        _
      // Predicated region
      $region21: #{mask_rcnn_loss.1} parent=11 // pred_check
        %p263 = pneg %p158
      $region22: #{mask_rcnn_loss.1} parent=11 // pred_check_branch
        %265 = sbr.rel (%p263) target = $region24
      $region23: #{mask_rcnn_loss.1} parent=11 // pred_region
        _
      $region24: #{mask_rcnn_loss.1} parent=11 // pred_fallthru
        _
    $region12: #{mask_rcnn_loss.1} parent=5 // pred_fallthru
      _
    %p266 = scmp.lt.s32.totalorder %s16, 2
    // Predicated region
    $region25: #{mask_rcnn_loss.1} parent=5 // pred_check
      %p267 = pneg %p266
    $region26: #{mask_rcnn_loss.1} parent=5 // pred_check_branch
      %269 = sbr.rel (%p267) target = $region28
    $region27: #{mask_rcnn_loss.1} parent=5 // pred_region
      // Predicated region
      $region29: #{mask_rcnn_loss.1} parent=27 // pred_check
        %p270 = pneg %p59
      $region30: #{mask_rcnn_loss.1} parent=27 // pred_check_branch
        %272 = sbr.rel (%p270) target = $region32
      $region31: #{mask_rcnn_loss.1} parent=27 // pred_region
        %s273 = sadd.s32 %s24, %s25
        %s274 = smul.u32 2, %s273
        %p275 = scmp.lt.s32.totalorder %s23, 1
        %s276 = scalar_select %p275, %s23, 1
        %p277 = scmp.lt.s32.totalorder %s274, 1
        %s278 = scalar_select %p277, %s274, 1
        %s279 = smul.addr %s276, 2
        %s280 = sadd.s32 %s278, %s279
        %s281 = smul.addr %s280, 2
        %s282 = scalar_lea.vmem %s0, %s281
        %s283 = sadd.s32 %s24, %s25
        %s284 = smul.u32 2, %s283
      $region32: #{mask_rcnn_loss.1} parent=27 // pred_fallthru
        _
      // Predicated region
      $region33: #{mask_rcnn_loss.1} parent=27 // pred_check
        %p285 = pneg %p89
      $region34: #{mask_rcnn_loss.1} parent=27 // pred_check_branch
        %287 = sbr.rel (%p285) target = $region36
      $region35: #{mask_rcnn_loss.1} parent=27 // pred_region
        %s288 = sadd.s32 %s24, %s25
        %s289 = smul.u32 2, %s288
        %p290 = scmp.lt.s32.totalorder %s23, 1
        %s291 = scalar_select %p290, %s23, 1
        %p292 = scmp.lt.s32.totalorder %s289, 1
        %s293 = scalar_select %p292, %s289, 1
        %s294 = smul.addr %s291, 2
        %s295 = sadd.s32 %s293, %s294
        %s296 = smul.addr %s295, 2
        %s297 = scalar_lea.vmem %s1, %s296
        %s298 = sadd.s32 %s24, %s25
        %s299 = smul.u32 2, %s298
      $region36: #{mask_rcnn_loss.1} parent=27 // pred_fallthru
        _
    $region28: #{mask_rcnn_loss.1} parent=5 // pred_fallthru
      _
    %p300 = scmp.le.s32.totalorder 1, %s16
    %p301 = scmp.lt.s32.totalorder %s16, 3
    %p302 = pnand %p300, %p301
    %p303 = pneg %p302
    // Predicated region
    $region37: #{mask_rcnn_loss.1} parent=5 // pred_check
      _
    $region38: #{mask_rcnn_loss.1} parent=5 // pred_check_branch
      %305 = sbr.rel (%p302) target = $region40
    $region39: #{mask_rcnn_loss.1} parent=5 // pred_region
      %s306 = ssub.s32 %s16, 1
      %s307 = sadd.s32 %s27, %s28
      %s308 = smul.u32 2, %s307
      %p309 = scmp.lt.s32.totalorder %s26, 1
      %s310 = scalar_select %p309, %s26, 1
      %p311 = scmp.lt.s32.totalorder %s308, 1
      %s312 = scalar_select %p311, %s308, 1
      %s313 = smul.addr %s310, 2
      %s314 = sadd.s32 %s312, %s313
      %s315 = smul.addr %s314, 2
      %s316 = scalar_lea.vmem %s0, %s315
      %p317 = pneg %p65
      %p318 = pneg %p62
      %s319 = sadd.s32 %s27, %s28
      %s320 = smul.u32 2, %s319
      %p321 = scmp.lt.s32.totalorder %s26, 1
      %s322 = scalar_select %p321, %s26, 1
      %p323 = scmp.lt.s32.totalorder %s320, 1
      %s324 = scalar_select %p323, %s320, 1
      %s325 = smul.addr %s322, 2
      %s326 = sadd.s32 %s324, %s325
      %s327 = smul.addr %s326, 2
      %s328 = scalar_lea.vmem %s1, %s327
      %p329 = pneg %p95
      %p330 = pneg %p92
      %p331 = pneg %p116
      %p332 = pneg %p113
      %p333 = pneg %p137
      %p334 = pneg %p134
      %p335 = pneg %p158
      %p336 = pneg %p155
      %p337 = pneg %p186
      %p338 = pneg %p183
      %p339 = scmp.lt.s32.totalorder %s26, 1
      %s340 = scalar_select %p339, %s26, 1
      %p341 = scmp.lt.s32.totalorder %s27, 0
      %s342 = scalar_select %p341, %s27, 0
      %s343 = smul.addr %s342, 2
      %s344 = smul.addr %s340, 2
      %s345 = sadd.s32 %s343, %s344
      %s346 = scalar_lea.vmem %s5, %s345
      %p347 = pneg %p214
      %p348 = pneg %p211
      %p349 = scmp.lt.s32.totalorder %s26, 1
      %s350 = scalar_select %p349, %s26, 1
      %p351 = scmp.lt.s32.totalorder %s27, 0
      %s352 = scalar_select %p351, %s27, 0
      %s353 = smul.addr %s352, 2
      %s354 = smul.addr %s350, 2
      %s355 = sadd.s32 %s353, %s354
      %s356 = scalar_lea.vmem %s6, %s355
      %p357 = pneg %p242
      %p358 = pneg %p239
      %p359 = scmp.lt.s32.totalorder %s26, 1
      %s360 = scalar_select %p359, %s26, 1
      %p361 = scmp.lt.s32.totalorder %s27, 0
      %s362 = scalar_select %p361, %s27, 0
      %s363 = smul.addr %s362, 2
      %s364 = smul.addr %s360, 2
      %s365 = sadd.s32 %s363, %s364
      %s366 = scalar_lea.vmem %s7, %s365
      %s367 = sadd.s32 %s27, %s28
      %s368 = smul.u32 2, %s367
      %p369 = scmp.lt.s32.totalorder %s26, 1
      %s370 = scalar_select %p369, %s26, 1
      %p371 = scmp.lt.s32.totalorder %s368, 1
      %s372 = scalar_select %p371, %s368, 1
      %s373 = smul.addr %s370, 2
      %s374 = sadd.s32 %s372, %s373
      %s375 = smul.addr %s374, 2
      %s376 = scalar_lea.vmem %s0, %s375
      %s377 = sadd.s32 %s27, %s28
      %s378 = smul.u32 2, %s377
      %s379 = sadd.s32 %s27, %s28
      %s380 = smul.u32 2, %s379
      %p381 = scmp.lt.s32.totalorder %s26, 1
      %s382 = scalar_select %p381, %s26, 1
      %p383 = scmp.lt.s32.totalorder %s380, 1
      %s384 = scalar_select %p383, %s380, 1
      %s385 = smul.addr %s382, 2
      %s386 = sadd.s32 %s384, %s385
      %s387 = smul.addr %s386, 2
      %s388 = scalar_lea.vmem %s1, %s387
      %s389 = sadd.s32 %s27, %s28
      %s390 = smul.u32 2, %s389
      %p391 = scmp.lt.s32.totalorder %s26, 1
      %s392 = scalar_select %p391, %s26, 1
      %p393 = scmp.lt.s32.totalorder %s27, 0
      %s394 = scalar_select %p393, %s27, 0
      %s395 = smul.addr %s394, 2
      %s396 = smul.addr %s392, 2
      %s397 = sadd.s32 %s395, %s396
      %s398 = scalar_lea.vmem %s5, %s397
      %p399 = scmp.lt.s32.totalorder %s26, 1
      %s400 = scalar_select %p399, %s26, 1
      %p401 = scmp.lt.s32.totalorder %s27, 0
      %s402 = scalar_select %p401, %s27, 0
      %s403 = smul.addr %s402, 2
      %s404 = smul.addr %s400, 2
      %s405 = sadd.s32 %s403, %s404
      %s406 = scalar_lea.vmem %s6, %s405
      %p407 = scmp.lt.s32.totalorder %s26, 1
      %s408 = scalar_select %p407, %s26, 1
      %p409 = scmp.lt.s32.totalorder %s27, 0
      %s410 = scalar_select %p409, %s27, 0
      %s411 = smul.addr %s410, 2
      %s412 = smul.addr %s408, 2
      %s413 = sadd.s32 %s411, %s412
      %s414 = scalar_lea.vmem %s7, %s413
      %p416 = scmp.eq.s32.totalorder %s28, 0
      // Predicated region
      $region41: #{mask_rcnn_loss.1} parent=39 // pred_check
        %p417 = pneg %p416
      $region42: #{mask_rcnn_loss.1} parent=39 // pred_check_branch
        %419 = sbr.rel (%p417) target = $region44
      $region43: #{mask_rcnn_loss.1} parent=39 // pred_region
        %v420 = vlaneseq
        %vm421 = vcmp.ge.s32.totalorder %v420, 0
        %vm422 = vcmp.lt.s32.totalorder %v420, 256
        %vm423 = vmand %vm421, %vm422
        %424 = vst.msk [vmem:[%s398] sm:$0x3] %vm423, 0.0
        %425 = vst.msk [vmem:[%s406] sm:$0x3] %vm423, 0.0
        %426 = vst.msk [vmem:[%s414] sm:$0x3] %vm423, 0.0
      $region44: #{mask_rcnn_loss.1} parent=39 // pred_fallthru
        _
      %v427 = vld [vmem:[%s376] sm:$0xf]
      %v428 = vld [vmem:[%s2] sm:$0xf]
      %v429 = vld [vmem:[%s2 + $0x4] sm:$0xf]
      %v430 = vld [vmem:[%s2 + $0x8] sm:$0xf]
      %v431 = vld [vmem:[%s2 + $0xc] sm:$0xf]
      %v436 = vunpack.c.l.b16 %v428
      %v437 = vunpack.c.l.b16 %v429
      %v438 = vunpack.c.l.b16 %v430
      %v439 = vunpack.c.l.b16 %v431
      %v440 = vpack.c.b16 %v437, %v436
      %v441 = vpack.c.b16 %v439, %v438
      %v444 = vunpack.c.l.s4 1983009808
      %v445 = vunpack.c.0.s8 %v444
      %v446 = vlaneseq
      %v447 = vshrl.u32 %v446, 7
      %v448 = vsub.s32 %v445, %v447
      %v449 = vrot.slane %v427, %v448
      %v450 = vcombine.high %v449, %v449
      %vm451 = vcmask 31744
      %v453 = vsel %vm451, %v440, 0
      %v456 = vsel %vm451, %v441, 0
      %vm458 = vcmask 1041408
      %v460 = vsel %vm458, %v449, 0
      %v463 = vsel %vm458, %v450, 0
      %465 = vmatprep.subr.bf16.mxu0 %v463
      %466 = vmatpush1.bf16.msra.mxu0 %v460
      %467 = vmatprep.subr.bf16.mxu0 0
      %468 = vmatpush1.bf16.msra.mxu0 0
      %469 = vmatprep.subr.bf16.mxu0 0
      %470 = vmatpush1.bf16.msra.mxu0 0
      %471 = vmatprep.subr.bf16.mxu0 0
      %472 = vmatpush1.bf16.msra.mxu0 0
      %473 = vmatprep.subr.bf16.mxu0 0
      %474 = vmatpush1.bf16.msra.mxu0 0
      %475 = vmatprep.subr.bf16.mxu0 0
      %476 = vmatpush1.bf16.msra.mxu0 0
      %477 = vmatprep.subr.bf16.mxu0 0
      %478 = vmatpush1.bf16.msra.mxu0 0
      %479 = vmatprep.subr.bf16.mxu0 0
      %480 = vmatpush1.bf16.msra.mxu0 0
      %481 = vmatprep.subr.bf16.mxu0 0
      %482 = vmatpush1.bf16.msra.mxu0 0
      %483 = vmatprep.subr.bf16.mxu0 0
      %484 = vmatpush1.bf16.msra.mxu0 0
      %485 = vmatprep.subr.bf16.mxu0 0
      %486 = vmatpush1.bf16.msra.mxu0 0
      %487 = vmatprep.subr.bf16.mxu0 0
      %488 = vmatpush1.bf16.msra.mxu0 0
      %489 = vmatprep.subr.bf16.mxu0 0
      %490 = vmatpush1.bf16.msra.mxu0 0
      %491 = vmatprep.subr.bf16.mxu0 0
      %492 = vmatpush1.bf16.msra.mxu0 0
      %493 = vmatprep.subr.bf16.mxu0 0
      %494 = vmatpush1.bf16.msra.mxu0 0
      %495 = vmatprep.subr.bf16.mxu0 0
      %496 = vmatpush1.bf16.msra.mxu0 0
      %497 = vmatprep.mubr.bf16.mxu0 0
      %498 = vmatmul.mubr.bf16.gmra.mrb[0].mxu0 %v453
      %v499 = vpop.f32.mrb[0].mxu0
      %v500 = vadd.f32 0.0, %v499
      %v501 = vpop.f32.mrb[0].mxu0
      %v502 = vadd.f32 0.0, %v501
      %v503 = vpop.f32.mrb[0].mxu0
      %v504 = vadd.f32 0.0, %v503
      %v505 = vpop.f32.mrb[0].mxu0
      %v506 = vadd.f32 0.0, %v505
      %507 = vmatprep.mubr.bf16.mxu0 0
      %508 = vmatmul.mubr.bf16.gmra.mrb[0].mxu0 %v456
      %v509 = vpop.f32.mrb[0].mxu0
      %v510 = vadd.f32 0.0, %v509
      %v511 = vpop.f32.mrb[0].mxu0
      %v512 = vadd.f32 0.0, %v511
      %v513 = vpop.f32.mrb[0].mxu0
      %v514 = vadd.f32 0.0, %v513
      %v515 = vpop.f32.mrb[0].mxu0
      %v516 = vadd.f32 0.0, %v515
      %517 = vdwg.mxu0
      %v518 = vmax.f32 %v500, 0.0
      %v519 = vmax.f32 %v502, 0.0
      %v520 = vmax.f32 %v504, 0.0
      %v521 = vmax.f32 %v506, 0.0
      %v522 = vmax.f32 %v510, 0.0
      %v523 = vmax.f32 %v512, 0.0
      %v524 = vmax.f32 %v514, 0.0
      %v525 = vmax.f32 %v516, 0.0
      %v526 = vld [vmem:[%s3] sm:$0x1]
      %v527 = vld [vmem:[#allocation2] sm:$0x1]
      %529 = vset.pattern.permute.xlu0 0
      %530 = vperm.xlu0 %529, %v527
      %v531 = vpop.permute.xlu0 %530
      %v533 = vlaneseq
      %v534 = vshrl.u32 %v533, 7
      %v535 = vsub.s32 0, %v534
      %v536 = vrot.slane %v531, %v535
      %vm537 = vcmask 261120
      %v539 = vsel %vm537, %v526, 0
      %541 = vmatprep.subr.mxu0 %v519
      %542 = vmatpush1.msra.mxu0 %v518
      %543 = vmatprep.subr.mxu0 %v521
      %544 = vmatpush1.msra.mxu0 %v520
      %545 = vmatprep.subr.mxu0 %v523
      %546 = vmatpush1.msra.mxu0 %v522
      %547 = vmatprep.subr.mxu0 %v525
      %548 = vmatpush1.msra.mxu0 %v524
      %549 = vmatprep.subr.mxu0 0.0
      %550 = vmatpush1.msra.mxu0 0.0
      %551 = vmatprep.subr.mxu0 0.0
      %552 = vmatpush1.msra.mxu0 0.0
      %553 = vmatprep.subr.mxu0 0.0
      %554 = vmatpush1.msra.mxu0 0.0
      %555 = vmatprep.subr.mxu0 0.0
      %556 = vmatpush1.msra.mxu0 0.0
      %557 = vmatprep.subr.mxu0 0.0
      %558 = vmatpush1.msra.mxu0 0.0
      %559 = vmatprep.subr.mxu0 0.0
      %560 = vmatpush1.msra.mxu0 0.0
      %561 = vmatprep.subr.mxu0 0.0
      %562 = vmatpush1.msra.mxu0 0.0
      %563 = vmatprep.subr.mxu0 0.0
      %564 = vmatpush1.msra.mxu0 0.0
      %565 = vmatprep.subr.mxu0 0.0
      %566 = vmatpush1.msra.mxu0 0.0
      %567 = vmatprep.subr.mxu0 0.0
      %568 = vmatpush1.msra.mxu0 0.0
      %569 = vmatprep.subr.mxu0 0.0
      %570 = vmatpush1.msra.mxu0 0.0
      %571 = vmatprep.subr.mxu0 0.0
      %572 = vmatpush1.msra.mxu0 0.0
      %573 = vmatprep.subr.mxu0 0.0
      %574 = vmatpush1.msra.mxu0 0.0
      %575 = vmatprep.subr.mxu0 0.0
      %576 = vmatpush1.msra.mxu0 0.0
      %577 = vmatprep.subr.mxu0 0.0
      %578 = vmatpush1.msra.mxu0 0.0
      %579 = vmatprep.subr.mxu0 0.0
      %580 = vmatpush1.msra.mxu0 0.0
      %581 = vmatprep.subr.mxu0 0.0
      %582 = vmatpush1.msra.mxu0 0.0
      %583 = vmatprep.subr.mxu0 0.0
      %584 = vmatpush1.msra.mxu0 0.0
      %585 = vmatprep.subr.mxu0 0.0
      %586 = vmatpush1.msra.mxu0 0.0
      %587 = vmatprep.subr.mxu0 0.0
      %588 = vmatpush1.msra.mxu0 0.0
      %589 = vmatprep.subr.mxu0 0.0
      %590 = vmatpush1.msra.mxu0 0.0
      %591 = vmatprep.subr.mxu0 0.0
      %592 = vmatpush1.msra.mxu0 0.0
      %593 = vmatprep.subr.mxu0 0.0
      %594 = vmatpush1.msra.mxu0 0.0
      %595 = vmatprep.subr.mxu0 0.0
      %596 = vmatpush1.msra.mxu0 0.0
      %597 = vmatprep.subr.mxu0 0.0
      %598 = vmatpush1.msra.mxu0 0.0
      %599 = vmatprep.subr.mxu0 0.0
      %600 = vmatpush1.msra.mxu0 0.0
      %601 = vmatprep.subr.mxu0 0.0
      %602 = vmatpush1.msra.mxu0 0.0
      %603 = vmatprep.subr.mxu0 0.0
      %604 = vmatpush1.msra.mxu0 0.0
      %605 = vmatprep.mubr.f32.mxu0 0.0
      %606 = vmatmul.mubr.f32.gmra.mrb[0].mxu0 %v539
      %v607 = vpop.f32.mrb[0].mxu0
      %v608 = vadd.f32 %v536, %v607
      %v609 = vpop.f32.mrb[0].mxu0
      %v610 = vadd.f32 %v536, %v609
      %611 = vdwg.mxu0
      %v612 = vld [vmem:[%s388] sm:$0xf]
      %v615 = vunpack.c.l.s4 1983009808
      %v616 = vunpack.c.0.s8 %v615
      %v617 = vlaneseq
      %v618 = vshrl.u32 %v617, 7
      %v619 = vsub.s32 %v616, %v618
      %v620 = vrot.slane %v612, %v619
      %v621 = vcombine.high %v620, %v620
      %v623 = vsel %vm458, %v620, 0
      %v626 = vsel %vm458, %v621, 0
      %628 = vmatprep.subr.bf16.mxu0 %v626
      %629 = vmatpush1.bf16.msra.mxu0 %v623
      %630 = vmatprep.subr.bf16.mxu0 0
      %631 = vmatpush1.bf16.msra.mxu0 0
      %632 = vmatprep.subr.bf16.mxu0 0
      %633 = vmatpush1.bf16.msra.mxu0 0
      %634 = vmatprep.subr.bf16.mxu0 0
      %635 = vmatpush1.bf16.msra.mxu0 0
      %636 = vmatprep.subr.bf16.mxu0 0
      %637 = vmatpush1.bf16.msra.mxu0 0
      %638 = vmatprep.subr.bf16.mxu0 0
      %639 = vmatpush1.bf16.msra.mxu0 0
      %640 = vmatprep.subr.bf16.mxu0 0
      %641 = vmatpush1.bf16.msra.mxu0 0
      %642 = vmatprep.subr.bf16.mxu0 0
      %643 = vmatpush1.bf16.msra.mxu0 0
      %644 = vmatprep.subr.bf16.mxu0 0
      %645 = vmatpush1.bf16.msra.mxu0 0
      %646 = vmatprep.subr.bf16.mxu0 0
      %647 = vmatpush1.bf16.msra.mxu0 0
      %648 = vmatprep.subr.bf16.mxu0 0
      %649 = vmatpush1.bf16.msra.mxu0 0
      %650 = vmatprep.subr.bf16.mxu0 0
      %651 = vmatpush1.bf16.msra.mxu0 0
      %652 = vmatprep.subr.bf16.mxu0 0
      %653 = vmatpush1.bf16.msra.mxu0 0
      %654 = vmatprep.subr.bf16.mxu0 0
      %655 = vmatpush1.bf16.msra.mxu0 0
      %656 = vmatprep.subr.bf16.mxu0 0
      %657 = vmatpush1.bf16.msra.mxu0 0
      %658 = vmatprep.subr.bf16.mxu0 0
      %659 = vmatpush1.bf16.msra.mxu0 0
      %660 = vmatprep.mubr.bf16.mxu0 0
      %661 = vmatmul.mubr.bf16.gmra.mrb[0].mxu0 %v453
      %v662 = vpop.f32.mrb[0].mxu0
      %v663 = vadd.f32 0.0, %v662
      %v664 = vpop.f32.mrb[0].mxu0
      %v665 = vadd.f32 0.0, %v664
      %v666 = vpop.f32.mrb[0].mxu0
      %v667 = vadd.f32 0.0, %v666
      %v668 = vpop.f32.mrb[0].mxu0
      %v669 = vadd.f32 0.0, %v668
      %670 = vmatprep.mubr.bf16.mxu0 0
      %671 = vmatmul.mubr.bf16.gmra.mrb[0].mxu0 %v456
      %v672 = vpop.f32.mrb[0].mxu0
      %v673 = vadd.f32 0.0, %v672
      %v674 = vpop.f32.mrb[0].mxu0
      %v675 = vadd.f32 0.0, %v674
      %v676 = vpop.f32.mrb[0].mxu0
      %v677 = vadd.f32 0.0, %v676
      %v678 = vpop.f32.mrb[0].mxu0
      %v679 = vadd.f32 0.0, %v678
      %680 = vdwg.mxu0
      %v681 = vmax.f32 %v663, 0.0
      %v682 = vmax.f32 %v665, 0.0
      %v683 = vmax.f32 %v667, 0.0
      %v684 = vmax.f32 %v669, 0.0
      %v685 = vmax.f32 %v673, 0.0
      %v686 = vmax.f32 %v675, 0.0
      %v687 = vmax.f32 %v677, 0.0
      %v688 = vmax.f32 %v679, 0.0
      %689 = vmatprep.subr.mxu0 %v682
      %690 = vmatpush1.msra.mxu0 %v681
      %691 = vmatprep.subr.mxu0 %v684
      %692 = vmatpush1.msra.mxu0 %v683
      %693 = vmatprep.subr.mxu0 %v686
      %694 = vmatpush1.msra.mxu0 %v685
      %695 = vmatprep.subr.mxu0 %v688
      %696 = vmatpush1.msra.mxu0 %v687
      %697 = vmatprep.subr.mxu0 0.0
      %698 = vmatpush1.msra.mxu0 0.0
      %699 = vmatprep.subr.mxu0 0.0
      %700 = vmatpush1.msra.mxu0 0.0
      %701 = vmatprep.subr.mxu0 0.0
      %702 = vmatpush1.msra.mxu0 0.0
      %703 = vmatprep.subr.mxu0 0.0
      %704 = vmatpush1.msra.mxu0 0.0
      %705 = vmatprep.subr.mxu0 0.0
      %706 = vmatpush1.msra.mxu0 0.0
      %707 = vmatprep.subr.mxu0 0.0
      %708 = vmatpush1.msra.mxu0 0.0
      %709 = vmatprep.subr.mxu0 0.0
      %710 = vmatpush1.msra.mxu0 0.0
      %711 = vmatprep.subr.mxu0 0.0
      %712 = vmatpush1.msra.mxu0 0.0
      %713 = vmatprep.subr.mxu0 0.0
      %714 = vmatpush1.msra.mxu0 0.0
      %715 = vmatprep.subr.mxu0 0.0
      %716 = vmatpush1.msra.mxu0 0.0
      %717 = vmatprep.subr.mxu0 0.0
      %718 = vmatpush1.msra.mxu0 0.0
      %719 = vmatprep.subr.mxu0 0.0
      %720 = vmatpush1.msra.mxu0 0.0
      %721 = vmatprep.subr.mxu0 0.0
      %722 = vmatpush1.msra.mxu0 0.0
      %723 = vmatprep.subr.mxu0 0.0
      %724 = vmatpush1.msra.mxu0 0.0
      %725 = vmatprep.subr.mxu0 0.0
      %726 = vmatpush1.msra.mxu0 0.0
      %727 = vmatprep.subr.mxu0 0.0
      %728 = vmatpush1.msra.mxu0 0.0
      %729 = vmatprep.subr.mxu0 0.0
      %730 = vmatpush1.msra.mxu0 0.0
      %731 = vmatprep.subr.mxu0 0.0
      %732 = vmatpush1.msra.mxu0 0.0
      %733 = vmatprep.subr.mxu0 0.0
      %734 = vmatpush1.msra.mxu0 0.0
      %735 = vmatprep.subr.mxu0 0.0
      %736 = vmatpush1.msra.mxu0 0.0
      %737 = vmatprep.subr.mxu0 0.0
      %738 = vmatpush1.msra.mxu0 0.0
      %739 = vmatprep.subr.mxu0 0.0
      %740 = vmatpush1.msra.mxu0 0.0
      %741 = vmatprep.subr.mxu0 0.0
      %742 = vmatpush1.msra.mxu0 0.0
      %743 = vmatprep.subr.mxu0 0.0
      %744 = vmatpush1.msra.mxu0 0.0
      %745 = vmatprep.subr.mxu0 0.0
      %746 = vmatpush1.msra.mxu0 0.0
      %747 = vmatprep.subr.mxu0 0.0
      %748 = vmatpush1.msra.mxu0 0.0
      %749 = vmatprep.subr.mxu0 0.0
      %750 = vmatpush1.msra.mxu0 0.0
      %751 = vmatprep.subr.mxu0 0.0
      %752 = vmatpush1.msra.mxu0 0.0
      %753 = vmatprep.mubr.f32.mxu0 0.0
      %754 = vmatmul.mubr.f32.gmra.mrb[0].mxu0 %v539
      %v755 = vpop.f32.mrb[0].mxu0
      %v756 = vadd.f32 %v536, %v755
      %v757 = vpop.f32.mrb[0].mxu0
      %v758 = vadd.f32 %v536, %v757
      %759 = vdwg.mxu0
      %vm760 = vcmp.gt.f32.partialorder %v756, 0.0
      %vm761 = vcmp.gt.f32.partialorder %v758, 0.0
      %v762 = vsel %vm760, 1, 0
      %v763 = vsel %vm761, 1, 0
      %v764 = vcvt.s32.f32 %v762
      %v765 = vcvt.s32.f32 %v763
      %vm766 = vcmp.gt.f32.partialorder %v608, 0.0
      %vm767 = vcmp.gt.f32.partialorder %v610, 0.0
      %v768 = vsel %vm766, 1, 0
      %v769 = vsel %vm767, 1, 0
      %v770 = vcvt.s32.f32 %v768
      %v771 = vcvt.s32.f32 %v769
      %v772 = vmax.f32 %v608, 0.0
      %v773 = vmax.f32 %v610, 0.0
      %v774 = vmul.f32 %v608, %v764
      %v775 = vmul.f32 %v610, %v765
      %v776 = vsub.f32 %v772, %v774
      %v777 = vsub.f32 %v773, %v775
      %v778 = vand.u32 2147483647, %v608
      %v779 = vand.u32 2147483647, %v610
      %v780 = vsub.f32 0.0, %v778
      %v781 = vsub.f32 0.0, %v779
      %v782 = vmul.f32 %v780, 1.442695
      %v783 = vpow.pop %v782
      %v784 = vmul.f32 %v781, 1.442695
      %v785 = vpow.pop %v784
      %v786 = vadd.f32 %v783, 1.0
      %v787 = vlog2.pop %v786
      %v788 = vmul.f32 %v787, 0.6931472
      %v789 = vmul.f32 -0.5, %v783
      %v790 = vadd.f32 %v789, 1.0
      %v791 = vmul.f32 %v790, %v783
      %v792 = vand.u32 2147483647, %v783
      %vm793 = vcmp.lt.f32.partialorder %v792, 0.0004427343
      %v794 = vsel %vm793, %v791, %v788
      %v795 = vadd.f32 %v785, 1.0
      %v796 = vlog2.pop %v795
      %v797 = vmul.f32 %v796, 0.6931472
      %v798 = vmul.f32 -0.5, %v785
      %v799 = vadd.f32 %v798, 1.0
      %v800 = vmul.f32 %v799, %v785
      %v801 = vand.u32 2147483647, %v785
      %vm802 = vcmp.lt.f32.partialorder %v801, 0.0004427343
      %v803 = vsel %vm802, %v800, %v797
      %v804 = vadd.f32 %v776, %v794
      %v805 = vadd.f32 %v777, %v803
      %v806 = vmul.f32 %v770, %v764
      %v807 = vmul.f32 %v771, %v765
      %v808 = vmax.f32 %v770, %v764
      %v809 = vmax.f32 %v771, %v765
      %v810 = vld [vmem:[%s398] sm:$0x3]
      %v813 = vcombine.low %v804, %v805
      %v815 = vunpack.c.l.s4 1966171168
      %v816 = vunpack.c.0.s8 %v815
      %v817 = vlaneseq
      %v818 = vshrl.u32 %v817, 7
      %v819 = vsub.s32 %v816, %v818
      %v820 = vrot.slane %v813, %v819
      %v822 = vunpack.c.l.s4 1966171168
      %v823 = vunpack.c.0.s8 %v822
      %v824 = vlaneseq
      %v825 = vshrl.u32 %v824, 7
      %v826 = vsub.s32 %v823, %v825
      %v827 = vrot.slane %v820, %v826
      %v829 = vadd.f32 %v810, %v827
      %v830 = vlaneseq
      %vm831 = vcmp.ge.s32.totalorder %v830, 0
      %vm832 = vcmp.lt.s32.totalorder %v830, 256
      %vm833 = vmand %vm831, %vm832
      %834 = vst.msk [vmem:[%s398] sm:$0x3] %vm833, %v829
      %v835 = vld [vmem:[%s406] sm:$0x3]
      %v838 = vcombine.low %v806, %v807
      %v840 = vunpack.c.l.s4 1966171168
      %v841 = vunpack.c.0.s8 %v840
      %v842 = vlaneseq
      %v843 = vshrl.u32 %v842, 7
      %v844 = vsub.s32 %v841, %v843
      %v845 = vrot.slane %v838, %v844
      %v847 = vunpack.c.l.s4 1966171168
      %v848 = vunpack.c.0.s8 %v847
      %v849 = vlaneseq
      %v850 = vshrl.u32 %v849, 7
      %v851 = vsub.s32 %v848, %v850
      %v852 = vrot.slane %v845, %v851
      %v854 = vadd.f32 %v835, %v852
      %855 = vst.msk [vmem:[%s406] sm:$0x3] %vm833, %v854
      %v856 = vld [vmem:[%s414] sm:$0x3]
      %v859 = vcombine.low %v808, %v809
      %v861 = vunpack.c.l.s4 1966171168
      %v862 = vunpack.c.0.s8 %v861
      %v863 = vlaneseq
      %v864 = vshrl.u32 %v863, 7
      %v865 = vsub.s32 %v862, %v864
      %v866 = vrot.slane %v859, %v865
      %v868 = vunpack.c.l.s4 1966171168
      %v869 = vunpack.c.0.s8 %v868
      %v870 = vlaneseq
      %v871 = vshrl.u32 %v870, 7
      %v872 = vsub.s32 %v869, %v871
      %v873 = vrot.slane %v866, %v872
      %v875 = vadd.f32 %v856, %v873
      %876 = vst.msk [vmem:[%s414] sm:$0x3] %vm833, %v875
      %p877 = scmp.lt.s32.totalorder %s26, 1
      %s878 = scalar_select %p877, %s26, 1
      %p879 = scmp.lt.s32.totalorder %s27, 0
      %s880 = scalar_select %p879, %s27, 0
      %s881 = smul.addr %s880, 2
      %s882 = smul.addr %s878, 2
      %s883 = sadd.s32 %s881, %s882
      %s884 = scalar_lea.vmem %s5, %s883
      %p885 = scmp.lt.s32.totalorder %s26, 1
      %s886 = scalar_select %p885, %s26, 1
      %p887 = scmp.lt.s32.totalorder %s27, 0
      %s888 = scalar_select %p887, %s27, 0
      %s889 = smul.addr %s888, 2
      %s890 = smul.addr %s886, 2
      %s891 = sadd.s32 %s889, %s890
      %s892 = scalar_lea.vmem %s6, %s891
      %p893 = scmp.lt.s32.totalorder %s26, 1
      %s894 = scalar_select %p893, %s26, 1
      %p895 = scmp.lt.s32.totalorder %s27, 0
      %s896 = scalar_select %p895, %s27, 0
      %s897 = smul.addr %s896, 2
      %s898 = smul.addr %s894, 2
      %s899 = sadd.s32 %s897, %s898
      %s900 = scalar_lea.vmem %s7, %s899
      // Predicated region
      $region45: #{mask_rcnn_loss.1} parent=39 // pred_check
        %p901 = pneg %p183
      $region46: #{mask_rcnn_loss.1} parent=39 // pred_check_branch
        %903 = sbr.rel (%p901) target = $region48
      $region47: #{mask_rcnn_loss.1} parent=39 // pred_region
        _
      $region48: #{mask_rcnn_loss.1} parent=39 // pred_fallthru
        _
      // Predicated region
      $region49: #{mask_rcnn_loss.1} parent=39 // pred_check
        %p904 = pneg %p211
      $region50: #{mask_rcnn_loss.1} parent=39 // pred_check_branch
        %906 = sbr.rel (%p904) target = $region52
      $region51: #{mask_rcnn_loss.1} parent=39 // pred_region
        _
      $region52: #{mask_rcnn_loss.1} parent=39 // pred_fallthru
        _
      // Predicated region
      $region53: #{mask_rcnn_loss.1} parent=39 // pred_check
        %p907 = pneg %p239
      $region54: #{mask_rcnn_loss.1} parent=39 // pred_check_branch
        %909 = sbr.rel (%p907) target = $region56
      $region55: #{mask_rcnn_loss.1} parent=39 // pred_region
        _
      $region56: #{mask_rcnn_loss.1} parent=39 // pred_fallthru
        _
    $region40: #{mask_rcnn_loss.1} parent=5 // pred_fallthru
      _
    %p910 = scmp.le.s32.totalorder 2, %s16
    // Predicated region
    $region57: #{mask_rcnn_loss.1} parent=5 // pred_check
      %p911 = pneg %p910
    $region58: #{mask_rcnn_loss.1} parent=5 // pred_check_branch
      %913 = sbr.rel (%p911) target = $region60
    $region59: #{mask_rcnn_loss.1} parent=5 // pred_region
      %s914 = ssub.s32 %s16, 2
      // Predicated region
      $region61: #{mask_rcnn_loss.1} parent=59 // pred_check
        %p915 = pneg %p189
      $region62: #{mask_rcnn_loss.1} parent=59 // pred_check_branch
        %917 = sbr.rel (%p915) target = $region64
      $region63: #{mask_rcnn_loss.1} parent=59 // pred_region
        %p918 = scmp.lt.s32.totalorder %s29, 1
        %s919 = scalar_select %p918, %s29, 1
        %p920 = scmp.lt.s32.totalorder %s30, 0
        %s921 = scalar_select %p920, %s30, 0
        %s922 = smul.addr %s921, 2
        %s923 = smul.addr %s919, 2
        %s924 = sadd.s32 %s922, %s923
        %s925 = scalar_lea.vmem %s5, %s924
      $region64: #{mask_rcnn_loss.1} parent=59 // pred_fallthru
        _
      // Predicated region
      $region65: #{mask_rcnn_loss.1} parent=59 // pred_check
        %p926 = pneg %p217
      $region66: #{mask_rcnn_loss.1} parent=59 // pred_check_branch
        %928 = sbr.rel (%p926) target = $region68
      $region67: #{mask_rcnn_loss.1} parent=59 // pred_region
        %p929 = scmp.lt.s32.totalorder %s29, 1
        %s930 = scalar_select %p929, %s29, 1
        %p931 = scmp.lt.s32.totalorder %s30, 0
        %s932 = scalar_select %p931, %s30, 0
        %s933 = smul.addr %s932, 2
        %s934 = smul.addr %s930, 2
        %s935 = sadd.s32 %s933, %s934
        %s936 = scalar_lea.vmem %s6, %s935
      $region68: #{mask_rcnn_loss.1} parent=59 // pred_fallthru
        _
      // Predicated region
      $region69: #{mask_rcnn_loss.1} parent=59 // pred_check
        %p937 = pneg %p245
      $region70: #{mask_rcnn_loss.1} parent=59 // pred_check_branch
        %939 = sbr.rel (%p937) target = $region72
      $region71: #{mask_rcnn_loss.1} parent=59 // pred_region
        %p940 = scmp.lt.s32.totalorder %s29, 1
        %s941 = scalar_select %p940, %s29, 1
        %p942 = scmp.lt.s32.totalorder %s30, 0
        %s943 = scalar_select %p942, %s30, 0
        %s944 = smul.addr %s943, 2
        %s945 = smul.addr %s941, 2
        %s946 = sadd.s32 %s944, %s945
        %s947 = scalar_lea.vmem %s7, %s946
      $region72: #{mask_rcnn_loss.1} parent=59 // pred_fallthru
        _
    $region60: #{mask_rcnn_loss.1} parent=5 // pred_fallthru
      _
  $region6: #{mask_rcnn_loss.1} parent=0 // loop_footer
    %s20 = sadd.s32 1, %s16
  $region7: #{mask_rcnn_loss.1} parent=0 // loop_footer_branch
    %15 = sbr.rel target = $region3
  $region8: #{mask_rcnn_loss.1} parent=0 // loop_exit
    _

</llo_original>
